<compile_context>
chip_gen: v5e
topology: v5e:2x2
jax: 0.10.0
libtpu: 0.0.40
codegen_flags: <defaults>
</compile_context>

<pallas_src>
import jax
import jax.numpy as jnp
from jax.experimental import pallas as pl
from jax.experimental.pallas import tpu as pltpu


def _round_up(n, m):
    return ((n + m - 1) // m) * m


def fl_decoder_kernel(x_ref, w1_ref, b1_ref, w2_ref, b2_ref, w3_ref, b3_ref,
                      o_ref):
    # FC_hidden + LeakyReLU(0.2): bf16 MXU matmul, f32 accumulation,
    # elementwise in f32.
    h = jnp.dot(x_ref[...], w1_ref[...], preferred_element_type=jnp.float32)
    h = h + b1_ref[...]
    h = jnp.where(h > 0, h, 0.2 * h)

    # FC_hidden2 + LeakyReLU(0.2)
    h = jnp.dot(h.astype(w2_ref.dtype), w2_ref[...],
                preferred_element_type=jnp.float32)
    h = h + b2_ref[...]
    h = jnp.where(h > 0, h, 0.2 * h)

    # FC_output + sigmoid. Output lanes are padded to a multiple of 128 by the
    # wrapper, so this store is an unmasked, lane-dense vst.
    y = jnp.dot(h.astype(w3_ref.dtype), w3_ref[...],
                preferred_element_type=jnp.float32)
    y = y + b3_ref[...]
    o_ref[...] = jax.nn.sigmoid(y).astype(o_ref.dtype)


def fl_decoder(x, params, *, tile_b=None, compute_dtype=jnp.bfloat16,
               out_dtype=jnp.float32, vmem_limit_bytes=None):
    """x: (B, latent_dim) f32.  params: dict of (in,out) weights / (1,out) biases.

    out_dtype=jnp.bfloat16 can be passed to also halve the output HBM writeback.
    """
    w1, b1 = params["w1"], params["b1"]   # (L, H), (1, H)
    w2, b2 = params["w2"], params["b2"]   # (H, H), (1, H)
    w3, b3 = params["w3"], params["b3"]   # (H, O), (1, O)

    B, L = x.shape
    H = w1.shape[1]
    O = w3.shape[1]

    # --- batch tiling: big tiles amortize ~0.35 us/grid-step overhead and
    #     produce long contiguous DMAs; keep >=2 steps for v7x dual-TC. ---
    b8 = _round_up(B, 8)
    if tile_b is None:
        tile_b = min(1024, b8)
        if b8 // tile_b < 2 and b8 >= 16:
            tile_b = max(8, _round_up(b8 // 2, 8))
    tile_b = max(8, _round_up(tile_b, 8))

    Bp = _round_up(B, tile_b)
    if Bp != B:
        x = jnp.pad(x, ((0, Bp - B), (0, 0)))

    # --- lane-dense output: pad O to a multiple of 128 (zeros in w3/b3 give
    #     sigmoid(0)=0.5 in the padded columns, sliced off below). ---
    Op = _round_up(O, 128)
    if Op != O:
        w3 = jnp.pad(w3, ((0, 0), (0, Op - O)))
        b3 = jnp.pad(b3, ((0, 0), (0, Op - O)))

    # --- bf16 HBM traffic for activations/weights, f32 biases/accumulation ---
    x = x.astype(compute_dtype)
    w1 = w1.astype(compute_dtype)
    w2 = w2.astype(compute_dtype)
    w3 = w3.astype(compute_dtype)
    b1 = b1.astype(jnp.float32)
    b2 = b2.astype(jnp.float32)
    b3 = b3.astype(jnp.float32)

    grid = (Bp // tile_b,)

    in_specs = [
        pl.BlockSpec((tile_b, L), lambda i: (i, 0)),   # x (batch-tiled)
        pl.BlockSpec((L, H), lambda i: (0, 0)),        # w1 (VMEM-resident)
        pl.BlockSpec((1, H), lambda i: (0, 0)),        # b1
        pl.BlockSpec((H, H), lambda i: (0, 0)),        # w2
        pl.BlockSpec((1, H), lambda i: (0, 0)),        # b2
        pl.BlockSpec((H, Op), lambda i: (0, 0)),       # w3 (lane-padded)
        pl.BlockSpec((1, Op), lambda i: (0, 0)),       # b3
    ]
    out_spec = pl.BlockSpec((tile_b, Op), lambda i: (i, 0))

    out = pl.pallas_call(
        fl_decoder_kernel,
        out_shape=jax.ShapeDtypeStruct((Bp, Op), out_dtype),
        grid_spec=pltpu.PrefetchScalarGridSpec(
            num_scalar_prefetch=0,
            grid=grid,
            in_specs=in_specs,
            out_specs=out_spec,
        ),
        compiler_params=pltpu.CompilerParams(
            dimension_semantics=("parallel",),
            vmem_limit_bytes=vmem_limit_bytes,
        ),
    )(x, w1, b1, w2, b2, w3, b3)

    return out[:B, :O]


def init_params(key, latent_dim, hidden_dim, output_dim):
    """Deterministic synthetic params (already transposed to (in, out))."""
    ks = jax.random.split(key, 6)

    def lin(kw, kb, fan_in, fan_out):
        bound = 1.0 / jnp.sqrt(fan_in)
        w = jax.random.uniform(kw, (fan_in, fan_out), jnp.float32, -bound, bound)
        b = jax.random.uniform(kb, (1, fan_out), jnp.float32, -bound, bound)
        return w, b

    w1, b1 = lin(ks[0], ks[1], latent_dim, hidden_dim)
    w2, b2 = lin(ks[2], ks[3], hidden_dim, hidden_dim)
    w3, b3 = lin(ks[4], ks[5], hidden_dim, output_dim)
    return {"w1": w1, "b1": b1, "w2": w2, "b2": b2, "w3": w3, "b3": b3}


def fl_decoder_ref(x, p, compute_dtype=jnp.bfloat16):
    """Pure-JAX reference with the same bf16-in / f32-accumulate recipe."""
    cd = compute_dtype
    h = jnp.dot(x.astype(cd), p["w1"].astype(cd),
                preferred_element_type=jnp.float32) + p["b1"]
    h = jnp.where(h > 0, h, 0.2 * h)
    h = jnp.dot(h.astype(cd), p["w2"].astype(cd),
                preferred_element_type=jnp.float32) + p["b2"]
    h = jnp.where(h > 0, h, 0.2 * h)
    y = jnp.dot(h.astype(cd), p["w3"].astype(cd),
                preferred_element_type=jnp.float32) + p["b3"]
    return jax.nn.sigmoid(y)


if __name__ == "__main__":
    latent_dim, hidden_dim, output_dim = 16, 32, 64

    key = jax.random.PRNGKey(0)
    kx, kp = jax.random.split(key)
    params = init_params(kp, latent_dim, hidden_dim, output_dim)

    # Case 1: batch divisible by 8 (auto-tiling gives 2 parallel grid steps).
    x = jax.random.normal(kx, (16, latent_dim), jnp.float32)
    out = jax.block_until_ready(fl_decoder(x, params))
    ref = fl_decoder_ref(x, params)
    assert out.shape == (16, output_dim)
    assert jnp.allclose(out, ref, atol=2e-3, rtol=0), float(
        jnp.max(jnp.abs(out - ref)))

    # Case 2: ragged batch (exercises zero-padding of the batch axis).
    x2 = jax.random.normal(kx, (13, latent_dim), jnp.float32)
    out2 = jax.block_until_ready(fl_decoder(x2, params))
    ref2 = fl_decoder_ref(x2, params)
    assert out2.shape == (13, output_dim)
    assert jnp.allclose(out2, ref2, atol=2e-3, rtol=0), float(
        jnp.max(jnp.abs(out2 - ref2)))

    print("KERNEL_OK")
</pallas_src>

<mosaic_0001>
module attributes {stable_mosaic.version = 11 : i64} {
  func.func @fl_decoder_kernel(%arg0: i32, %arg1: memref<8x16xbf16, #tpu.memory_space<vmem>>, %arg2: memref<16x32xbf16, #tpu.memory_space<vmem>>, %arg3: memref<1x32xf32, #tpu.memory_space<vmem>>, %arg4: memref<32x32xbf16, #tpu.memory_space<vmem>>, %arg5: memref<1x32xf32, #tpu.memory_space<vmem>>, %arg6: memref<32x128xbf16, #tpu.memory_space<vmem>>, %arg7: memref<1x128xf32, #tpu.memory_space<vmem>>, %arg8: memref<8x128xf32, #tpu.memory_space<vmem>>) attributes {dimension_semantics = [#tpu.dimension_semantics<parallel>], iteration_bounds = array<i64: 2>, scalar_prefetch = 0 : i64, scratch_operands = 0 : i64, tpu.core_type = #tpu.core_type<tc>, window_params = [{transform_indices = @transform_0, window_bounds = array<i64: 8, 16>}, {pipeline_mode = #tpu.pipeline_mode<synchronous>, transform_indices = @transform_1, window_bounds = array<i64: 16, 32>}, {pipeline_mode = #tpu.pipeline_mode<synchronous>, transform_indices = @transform_2, window_bounds = array<i64: 1, 32>}, {pipeline_mode = #tpu.pipeline_mode<synchronous>, transform_indices = @transform_3, window_bounds = array<i64: 32, 32>}, {pipeline_mode = #tpu.pipeline_mode<synchronous>, transform_indices = @transform_4, window_bounds = array<i64: 1, 32>}, {pipeline_mode = #tpu.pipeline_mode<synchronous>, transform_indices = @transform_5, window_bounds = array<i64: 32, 128>}, {pipeline_mode = #tpu.pipeline_mode<synchronous>, transform_indices = @transform_6, window_bounds = array<i64: 1, 128>}, {transform_indices = @transform_7, window_bounds = array<i64: 8, 128>}]} {
    %c0 = arith.constant 0 : index
    %c0_0 = arith.constant 0 : index
    %0 = vector.load %arg1[%c0, %c0_0] : memref<8x16xbf16, #tpu.memory_space<vmem>>, vector<8x16xbf16>
    %c0_1 = arith.constant 0 : index
    %c0_2 = arith.constant 0 : index
    %1 = vector.load %arg2[%c0_1, %c0_2] : memref<16x32xbf16, #tpu.memory_space<vmem>>, vector<16x32xbf16>
    %cst = arith.constant dense<0.000000e+00> : vector<8x32xf32>
    %2 = tpu.matmul %0, %1, %cst {dimension_numbers = #tpu.dot_dimension_numbers<[1], [0], [0], [1], [0, 0, 1, 1], [], []>} : vector<8x16xbf16>, vector<16x32xbf16>, vector<8x32xf32> -> vector<8x32xf32>
    %c0_3 = arith.constant 0 : index
    %c0_4 = arith.constant 0 : index
    %3 = vector.load %arg3[%c0_3, %c0_4] : memref<1x32xf32, #tpu.memory_space<vmem>>, vector<1x32xf32>
    %4 = vector.broadcast %3 : vector<1x32xf32> to vector<8x32xf32>
    %5 = arith.addf %2, %4 : vector<8x32xf32>
    %cst_5 = arith.constant 0.000000e+00 : f32
    %6 = vector.broadcast %cst_5 : f32 to vector<8x32xf32>
    %7 = arith.cmpf ogt, %5, %6 : vector<8x32xf32>
    %cst_6 = arith.constant 2.000000e-01 : f32
    %8 = vector.broadcast %cst_6 : f32 to vector<8x32xf32>
    %9 = arith.mulf %8, %5 : vector<8x32xf32>
    %10 = arith.select %7, %5, %9 : vector<8x32xi1>, vector<8x32xf32>
    %11 = arith.truncf %10 : vector<8x32xf32> to vector<8x32xbf16>
    %c0_7 = arith.constant 0 : index
    %c0_8 = arith.constant 0 : index
    %12 = vector.load %arg4[%c0_7, %c0_8] : memref<32x32xbf16, #tpu.memory_space<vmem>>, vector<32x32xbf16>
    %cst_9 = arith.constant dense<0.000000e+00> : vector<8x32xf32>
    %13 = tpu.matmul %11, %12, %cst_9 {dimension_numbers = #tpu.dot_dimension_numbers<[1], [0], [0], [1], [0, 0, 1, 1], [], []>} : vector<8x32xbf16>, vector<32x32xbf16>, vector<8x32xf32> -> vector<8x32xf32>
    %c0_10 = arith.constant 0 : index
    %c0_11 = arith.constant 0 : index
    %14 = vector.load %arg5[%c0_10, %c0_11] : memref<1x32xf32, #tpu.memory_space<vmem>>, vector<1x32xf32>
    %15 = vector.broadcast %14 : vector<1x32xf32> to vector<8x32xf32>
    %16 = arith.addf %13, %15 : vector<8x32xf32>
    %cst_12 = arith.constant 0.000000e+00 : f32
    %17 = vector.broadcast %cst_12 : f32 to vector<8x32xf32>
    %18 = arith.cmpf ogt, %16, %17 : vector<8x32xf32>
    %cst_13 = arith.constant 2.000000e-01 : f32
    %19 = vector.broadcast %cst_13 : f32 to vector<8x32xf32>
    %20 = arith.mulf %19, %16 : vector<8x32xf32>
    %21 = arith.select %18, %16, %20 : vector<8x32xi1>, vector<8x32xf32>
    %22 = arith.truncf %21 : vector<8x32xf32> to vector<8x32xbf16>
    %c0_14 = arith.constant 0 : index
    %c0_15 = arith.constant 0 : index
    %23 = vector.load %arg6[%c0_14, %c0_15] : memref<32x128xbf16, #tpu.memory_space<vmem>>, vector<32x128xbf16>
    %cst_16 = arith.constant dense<0.000000e+00> : vector<8x128xf32>
    %24 = tpu.matmul %22, %23, %cst_16 {dimension_numbers = #tpu.dot_dimension_numbers<[1], [0], [0], [1], [0, 0, 1, 1], [], []>} : vector<8x32xbf16>, vector<32x128xbf16>, vector<8x128xf32> -> vector<8x128xf32>
    %c0_17 = arith.constant 0 : index
    %c0_18 = arith.constant 0 : index
    %25 = vector.load %arg7[%c0_17, %c0_18] : memref<1x128xf32, #tpu.memory_space<vmem>>, vector<1x128xf32>
    %26 = vector.broadcast %25 : vector<1x128xf32> to vector<8x128xf32>
    %27 = arith.addf %24, %26 : vector<8x128xf32>
    %28 = arith.negf %27 : vector<8x128xf32>
    %29 = math.exp %28 : vector<8x128xf32>
    %cst_19 = arith.constant 1.000000e+00 : f32
    %30 = vector.broadcast %cst_19 : f32 to vector<8x128xf32>
    %31 = arith.addf %30, %29 : vector<8x128xf32>
    %32 = arith.divf %30, %31 : vector<8x128xf32>
    %c0_20 = arith.constant 0 : index
    %c0_21 = arith.constant 0 : index
    %33 = vector.load %arg8[%c0_20, %c0_21] : memref<8x128xf32, #tpu.memory_space<vmem>>, vector<8x128xf32>
    tpu.vector_store %arg8[%c0_20, %c0_21], %32 {strides = array<i32>} : memref<8x128xf32, #tpu.memory_space<vmem>>, vector<8x128xf32>,
    return
  }
  func.func @transform_0(%arg0: i32) -> (i32, i32) {
    %c0_i32 = arith.constant 0 : i32
    %c0_i32_0 = arith.constant 0 : i32
    return %arg0, %c0_i32 : i32, i32
  }
  func.func @transform_1(%arg0: i32) -> (i32, i32) {
    %c0_i32 = arith.constant 0 : i32
    %c0_i32_0 = arith.constant 0 : i32
    %c0_i32_1 = arith.constant 0 : i32
    return %c0_i32, %c0_i32_0 : i32, i32
  }
  func.func @transform_2(%arg0: i32) -> (i32, i32) {
    %c0_i32 = arith.constant 0 : i32
    %c0_i32_0 = arith.constant 0 : i32
    %c0_i32_1 = arith.constant 0 : i32
    return %c0_i32, %c0_i32_0 : i32, i32
  }
  func.func @transform_3(%arg0: i32) -> (i32, i32) {
    %c0_i32 = arith.constant 0 : i32
    %c0_i32_0 = arith.constant 0 : i32
    %c0_i32_1 = arith.constant 0 : i32
    return %c0_i32, %c0_i32_0 : i32, i32
  }
  func.func @transform_4(%arg0: i32) -> (i32, i32) {
    %c0_i32 = arith.constant 0 : i32
    %c0_i32_0 = arith.constant 0 : i32
    %c0_i32_1 = arith.constant 0 : i32
    return %c0_i32, %c0_i32_0 : i32, i32
  }
  func.func @transform_5(%arg0: i32) -> (i32, i32) {
    %c0_i32 = arith.constant 0 : i32
    %c0_i32_0 = arith.constant 0 : i32
    %c0_i32_1 = arith.constant 0 : i32
    return %c0_i32, %c0_i32_0 : i32, i32
  }
  func.func @transform_6(%arg0: i32) -> (i32, i32) {
    %c0_i32 = arith.constant 0 : i32
    %c0_i32_0 = arith.constant 0 : i32
    %c0_i32_1 = arith.constant 0 : i32
    return %c0_i32, %c0_i32_0 : i32, i32
  }
  func.func @transform_7(%arg0: i32) -> (i32, i32) {
    %c0_i32 = arith.constant 0 : i32
    %c0_i32_0 = arith.constant 0 : i32
    return %arg0, %c0_i32 : i32, i32
  }
}

</mosaic_0001>

<llo_original>
// kernel: tpu_custom_call.1
$region0: #{tpu_custom_call.1}
  #allocation0 [shape = 'u32[]', space=smem, size = 0x4, offset = 0x4, fixed_abs, tag = 'smem constant byte address 0x4 - core index']
  #allocation1 [shape = 'u32[72,128]{1,0:T(1,128)}', space=vmem, size = 0x9000, scoped, tag = 'internal scratch']
  %s0 = inlined_call_operand.hbm [shape: bf16[16,16], index: 0, kind: input, shape index: {}]
  %s1 = inlined_call_operand.hbm [shape: bf16[16,32], index: 1, kind: input, shape index: {}]
  %s2 = inlined_call_operand.vmem [shape: f32[1,32], index: 2, kind: input, shape index: {}]
  %s3 = inlined_call_operand.hbm [shape: bf16[32,32], index: 3, kind: input, shape index: {}]
  %s4 = inlined_call_operand.vmem [shape: f32[1,32], index: 4, kind: input, shape index: {}]
  %s5 = inlined_call_operand.hbm [shape: bf16[32,128], index: 5, kind: input, shape index: {}]
  %s6 = inlined_call_operand.vmem [shape: f32[1,128], index: 6, kind: input, shape index: {}]
  %s7 = inlined_call_operand.hbm [shape: f32[16,128], index: 7, kind: output, shape index: {}]
  %s8 = sld [smem:[#allocation0]]
  $region77: #{tpu_custom_call.1} parent=0
    _
  %s10 = ssub.s32 1, %s8
  %s11 = scalar_select 0, %s10, %s8
  $region1: #{tpu_custom_call.1} parent=0
    #allocation2 [shape = 'u8[4096]{0}', space=vmem, size = 0x1000, scoped, tag = 'input window, operand 0']
    #allocation3 [shape = 's32[2]{0}', space=sflag, size = 0x8, scoped, tag = 'scoped memory for tpu_custom_call.1']
    #allocation4 [shape = 's32[2]{0}', space=sflag, size = 0x8, scoped, tag = 'scoped memory for tpu_custom_call.1']
    #allocation5 [shape = 'u8[4096]{0}', space=vmem, size = 0x1000, scoped, tag = 'input window, operand 1, single buffered']
    #allocation6 [shape = 's32[1]{0}', space=sflag, size = 0x4, scoped, tag = 'scoped memory for tpu_custom_call.1']
    #allocation7 [shape = 'u8[8192]{0}', space=vmem, size = 0x2000, scoped, tag = 'input window, operand 3, single buffered']
    #allocation8 [shape = 'u8[8192]{0}', space=vmem, size = 0x2000, scoped, tag = 'input window, operand 5, single buffered']
    #allocation9 [shape = 's32[1]{0}', space=sflag, size = 0x4, scoped, tag = 'scoped memory for tpu_custom_call.1']
    #allocation10 [shape = 'u8[8192]{0}', space=vmem, size = 0x2000, scoped, tag = 'output window, operand 0']
    %12 = vsyncpa [#allocation3], 0
    %s13 = scalar_lea.sflag [#allocation3], 1
    %14 = vsyncpa %s13, 0
    %15 = vsyncpa [#allocation6], 0
    %16 = vsyncpa [#allocation9], 0
    %17 = vsyncpa [#allocation4], 0
    %s18 = scalar_lea.sflag [#allocation4], 1
    %19 = vsyncpa %s18, 0
    loop: start=0, step=1, limit=4
    $region2: #{tpu_custom_call.1} parent=1 // loop_pre_header
      _
    $region3: #{tpu_custom_call.1} parent=1 // loop_header
      %s21 = sphi 0, %s25
      %p22 = scmp.ge.s32.totalorder %s21, 4
      %s31 = sphi 0, %s33
      %s34 = sphi 0, %s31
      %s35 = sphi 0, %s34
      %s51 = sphi 0, %s35
      %s55 = sphi 0, %s55
      %s57 = sphi 0, %s55
      %s58 = sphi 0, %s57
      %s72 = sphi 0, %s58
      %s76 = sphi 0, %s76
      %s78 = sphi 0, %s76
      %s79 = sphi 0, %s78
      %s93 = sphi 0, %s79
      %s97 = sphi 0, %s97
      %s99 = sphi 0, %s97
      %s100 = sphi 0, %s99
      %s114 = sphi 0, %s100
      %s118 = sphi 0, %s118
      %s120 = sphi 0, %s118
      %s121 = sphi 0, %s120
      %s135 = sphi 0, %s121
      %s139 = sphi 0, %s139
      %s141 = sphi 0, %s139
      %s142 = sphi 0, %s141
      %s156 = sphi 0, %s142
      %s160 = sphi 0, %s160
      %s162 = sphi 0, %s160
      %s163 = sphi 0, %s162
      %s177 = sphi 0, %s163
      %s183 = sphi 0, %s185
      %s186 = sphi 0, %s183
      %s187 = sphi 0, %s186
      %s203 = sphi 0, %s187
    $region4: #{tpu_custom_call.1} parent=1 // loop_header_branch
      %24 = sbr.rel (%p22) target = $region8
    $region5: #{tpu_custom_call.1} parent=1 // loop_body
      %s26 = ssub.s32 %s21, 1
      %s27 = ssub.s32 %s21, 2
      %s28 = sadd.s32 %s21, 1
      %s29 = ssub.s32 %s21, %s28
      %p30 = scmp.eq.s32.totalorder %s29, 0
      %s32 = sadd.s32 %s31, 1
      %s33 = scalar_select %p30, %s31, %s32
      %p36 = pneg %p30
      %p37 = scmp.eq.s32.totalorder %s21, 1
      %p38 = por %p36, %p37
      %p39 = scmp.ne.s32.totalorder %s31, %s34
      %p40 = scmp.eq.s32.totalorder %s21, 0
      %p41 = por %p39, %p40
      %p42 = scmp.ne.s32.totalorder %s31, %s34
      %p43 = scmp.eq.s32.totalorder %s26, 1
      %p44 = por %p42, %p43
      %p45 = scmp.ne.s32.totalorder %s34, %s35
      %p46 = scmp.eq.s32.totalorder %s26, 0
      %p47 = por %p45, %p46
      %p48 = scmp.ne.s32.totalorder %s34, %s35
      %p49 = scmp.eq.s32.totalorder %s27, 1
      %p50 = por %p48, %p49
      %p52 = scmp.ne.s32.totalorder %s35, %s51
      %p53 = scmp.eq.s32.totalorder %s27, 0
      %p54 = por %p52, %p53
      %s56 = sadd.s32 %s55, 1
      %p59 = scmp.eq.s32.totalorder %s21, 1
      %p60 = scmp.ne.s32.totalorder %s55, %s57
      %p61 = scmp.eq.s32.totalorder %s21, 0
      %p62 = por %p60, %p61
      %p63 = scmp.ne.s32.totalorder %s55, %s57
      %p64 = scmp.eq.s32.totalorder %s26, 1
      %p65 = por %p63, %p64
      %p66 = scmp.ne.s32.totalorder %s57, %s58
      %p67 = scmp.eq.s32.totalorder %s26, 0
      %p68 = por %p66, %p67
      %p69 = scmp.ne.s32.totalorder %s57, %s58
      %p70 = scmp.eq.s32.totalorder %s27, 1
      %p71 = por %p69, %p70
      %p73 = scmp.ne.s32.totalorder %s58, %s72
      %p74 = scmp.eq.s32.totalorder %s27, 0
      %p75 = por %p73, %p74
      %s77 = sadd.s32 %s76, 1
      %p80 = scmp.eq.s32.totalorder %s21, 1
      %p81 = scmp.ne.s32.totalorder %s76, %s78
      %p82 = scmp.eq.s32.totalorder %s21, 0
      %p83 = por %p81, %p82
      %p84 = scmp.ne.s32.totalorder %s76, %s78
      %p85 = scmp.eq.s32.totalorder %s26, 1
      %p86 = por %p84, %p85
      %p87 = scmp.ne.s32.totalorder %s78, %s79
      %p88 = scmp.eq.s32.totalorder %s26, 0
      %p89 = por %p87, %p88
      %p90 = scmp.ne.s32.totalorder %s78, %s79
      %p91 = scmp.eq.s32.totalorder %s27, 1
      %p92 = por %p90, %p91
      %p94 = scmp.ne.s32.totalorder %s79, %s93
      %p95 = scmp.eq.s32.totalorder %s27, 0
      %p96 = por %p94, %p95
      %s98 = sadd.s32 %s97, 1
      %p101 = scmp.eq.s32.totalorder %s21, 1
      %p102 = scmp.ne.s32.totalorder %s97, %s99
      %p103 = scmp.eq.s32.totalorder %s21, 0
      %p104 = por %p102, %p103
      %p105 = scmp.ne.s32.totalorder %s97, %s99
      %p106 = scmp.eq.s32.totalorder %s26, 1
      %p107 = por %p105, %p106
      %p108 = scmp.ne.s32.totalorder %s99, %s100
      %p109 = scmp.eq.s32.totalorder %s26, 0
      %p110 = por %p108, %p109
      %p111 = scmp.ne.s32.totalorder %s99, %s100
      %p112 = scmp.eq.s32.totalorder %s27, 1
      %p113 = por %p111, %p112
      %p115 = scmp.ne.s32.totalorder %s100, %s114
      %p116 = scmp.eq.s32.totalorder %s27, 0
      %p117 = por %p115, %p116
      %s119 = sadd.s32 %s118, 1
      %p122 = scmp.eq.s32.totalorder %s21, 1
      %p123 = scmp.ne.s32.totalorder %s118, %s120
      %p124 = scmp.eq.s32.totalorder %s21, 0
      %p125 = por %p123, %p124
      %p126 = scmp.ne.s32.totalorder %s118, %s120
      %p127 = scmp.eq.s32.totalorder %s26, 1
      %p128 = por %p126, %p127
      %p129 = scmp.ne.s32.totalorder %s120, %s121
      %p130 = scmp.eq.s32.totalorder %s26, 0
      %p131 = por %p129, %p130
      %p132 = scmp.ne.s32.totalorder %s120, %s121
      %p133 = scmp.eq.s32.totalorder %s27, 1
      %p134 = por %p132, %p133
      %p136 = scmp.ne.s32.totalorder %s121, %s135
      %p137 = scmp.eq.s32.totalorder %s27, 0
      %p138 = por %p136, %p137
      %s140 = sadd.s32 %s139, 1
      %p143 = scmp.eq.s32.totalorder %s21, 1
      %p144 = scmp.ne.s32.totalorder %s139, %s141
      %p145 = scmp.eq.s32.totalorder %s21, 0
      %p146 = por %p144, %p145
      %p147 = scmp.ne.s32.totalorder %s139, %s141
      %p148 = scmp.eq.s32.totalorder %s26, 1
      %p149 = por %p147, %p148
      %p150 = scmp.ne.s32.totalorder %s141, %s142
      %p151 = scmp.eq.s32.totalorder %s26, 0
      %p152 = por %p150, %p151
      %p153 = scmp.ne.s32.totalorder %s141, %s142
      %p154 = scmp.eq.s32.totalorder %s27, 1
      %p155 = por %p153, %p154
      %p157 = scmp.ne.s32.totalorder %s142, %s156
      %p158 = scmp.eq.s32.totalorder %s27, 0
      %p159 = por %p157, %p158
      %s161 = sadd.s32 %s160, 1
      %p164 = scmp.eq.s32.totalorder %s21, 1
      %p165 = scmp.ne.s32.totalorder %s160, %s162
      %p166 = scmp.eq.s32.totalorder %s21, 0
      %p167 = por %p165, %p166
      %p168 = scmp.ne.s32.totalorder %s160, %s162
      %p169 = scmp.eq.s32.totalorder %s26, 1
      %p170 = por %p168, %p169
      %p171 = scmp.ne.s32.totalorder %s162, %s163
      %p172 = scmp.eq.s32.totalorder %s26, 0
      %p173 = por %p171, %p172
      %p174 = scmp.ne.s32.totalorder %s162, %s163
      %p175 = scmp.eq.s32.totalorder %s27, 1
      %p176 = por %p174, %p175
      %p178 = scmp.ne.s32.totalorder %s163, %s177
      %p179 = scmp.eq.s32.totalorder %s27, 0
      %p180 = por %p178, %p179
      %s181 = ssub.s32 %s21, %s28
      %p182 = scmp.eq.s32.totalorder %s181, 0
      %s184 = sadd.s32 %s183, 1
      %s185 = scalar_select %p182, %s183, %s184
      %p188 = pneg %p182
      %p189 = scmp.eq.s32.totalorder %s21, 1
      %p190 = por %p188, %p189
      %p191 = scmp.ne.s32.totalorder %s183, %s186
      %p192 = scmp.eq.s32.totalorder %s21, 0
      %p193 = por %p191, %p192
      %p194 = scmp.ne.s32.totalorder %s183, %s186
      %p195 = scmp.eq.s32.totalorder %s26, 1
      %p196 = por %p194, %p195
      %p197 = scmp.ne.s32.totalorder %s186, %s187
      %p198 = scmp.eq.s32.totalorder %s26, 0
      %p199 = por %p197, %p198
      %p200 = scmp.ne.s32.totalorder %s186, %s187
      %p201 = scmp.eq.s32.totalorder %s27, 1
      %p202 = por %p200, %p201
      %p204 = scmp.ne.s32.totalorder %s187, %s203
      %p205 = scmp.eq.s32.totalorder %s27, 0
      %p206 = por %p204, %p205
      %p207 = scmp.le.s32.totalorder 1, %s21
      %p208 = scmp.lt.s32.totalorder %s21, 3
      %p209 = pnand %p207, %p208
      %p210 = pneg %p209
      // Predicated region
      $region9: #{tpu_custom_call.1} parent=5 // pred_check
        _
      $region10: #{tpu_custom_call.1} parent=5 // pred_check_branch
        %212 = sbr.rel (%p209) target = $region12
      $region11: #{tpu_custom_call.1} parent=5 // pred_region
        %s213 = ssub.s32 %s21, 1
        // Predicated region
        $region13: #{tpu_custom_call.1} parent=11 // pred_check
          %p214 = pneg %p68
        $region14: #{tpu_custom_call.1} parent=11 // pred_check_branch
          %216 = sbr.rel (%p214) target = $region16
        $region15: #{tpu_custom_call.1} parent=11 // pred_region
          %218 = vsyncadd [#allocation6], 0
          %s219 = sshll.u32 %s1, 4
          %s220 = int_to_ptr.hbm [resolvable:$true] %s219
          %s221 = sshll.u32 [#allocation5], 4
          %s222 = int_to_ptr.vmem [resolvable:$true] %s221
          %227 = dma.hbm_to_vmem [thread:$0]  %s220, 128, %s222, [#allocation6], 64, 64, 4
        $region16: #{tpu_custom_call.1} parent=11 // pred_fallthru
          _
        // Predicated region
        $region17: #{tpu_custom_call.1} parent=11 // pred_check
          %p228 = pneg %p89
        $region18: #{tpu_custom_call.1} parent=11 // pred_check_branch
          %230 = sbr.rel (%p228) target = $region20
        $region19: #{tpu_custom_call.1} parent=11 // pred_region
          _
        $region20: #{tpu_custom_call.1} parent=11 // pred_fallthru
          _
        // Predicated region
        $region21: #{tpu_custom_call.1} parent=11 // pred_check
          %p231 = pneg %p110
        $region22: #{tpu_custom_call.1} parent=11 // pred_check_branch
          %233 = sbr.rel (%p231) target = $region24
        $region23: #{tpu_custom_call.1} parent=11 // pred_region
          %235 = vsyncadd [#allocation6], 0
          %s236 = sshll.u32 %s3, 4
          %s237 = int_to_ptr.hbm [resolvable:$true] %s236
          %s238 = sshll.u32 [#allocation7], 4
          %s239 = int_to_ptr.vmem [resolvable:$true] %s238
          %244 = dma.hbm_to_vmem [thread:$0]  %s237, 256, %s239, [#allocation6], 64, 64, 4
        $region24: #{tpu_custom_call.1} parent=11 // pred_fallthru
          _
        // Predicated region
        $region25: #{tpu_custom_call.1} parent=11 // pred_check
          %p245 = pneg %p131
        $region26: #{tpu_custom_call.1} parent=11 // pred_check_branch
          %247 = sbr.rel (%p245) target = $region28
        $region27: #{tpu_custom_call.1} parent=11 // pred_region
          _
        $region28: #{tpu_custom_call.1} parent=11 // pred_fallthru
          _
        // Predicated region
        $region29: #{tpu_custom_call.1} parent=11 // pred_check
          %p248 = pneg %p152
        $region30: #{tpu_custom_call.1} parent=11 // pred_check_branch
          %250 = sbr.rel (%p248) target = $region32
        $region31: #{tpu_custom_call.1} parent=11 // pred_region
          %252 = vsyncadd [#allocation9], 0
          %s253 = sshll.u32 %s5, 4
          %s254 = int_to_ptr.hbm [resolvable:$true] %s253
          %s255 = sshll.u32 [#allocation8], 4
          %s256 = int_to_ptr.vmem [resolvable:$true] %s255
          %261 = dma.hbm_to_vmem [thread:$0]  %s254, 256, %s256, [#allocation9], 64, 64, 4
        $region32: #{tpu_custom_call.1} parent=11 // pred_fallthru
          _
        // Predicated region
        $region33: #{tpu_custom_call.1} parent=11 // pred_check
          %p262 = pneg %p173
        $region34: #{tpu_custom_call.1} parent=11 // pred_check_branch
          %264 = sbr.rel (%p262) target = $region36
        $region35: #{tpu_custom_call.1} parent=11 // pred_region
          _
        $region36: #{tpu_custom_call.1} parent=11 // pred_fallthru
          _
      $region12: #{tpu_custom_call.1} parent=5 // pred_fallthru
        _
      %p265 = scmp.lt.s32.totalorder %s21, 2
      // Predicated region
      $region37: #{tpu_custom_call.1} parent=5 // pred_check
        %p266 = pneg %p265
      $region38: #{tpu_custom_call.1} parent=5 // pred_check_branch
        %268 = sbr.rel (%p266) target = $region40
      $region39: #{tpu_custom_call.1} parent=5 // pred_region
        // Predicated region
        $region41: #{tpu_custom_call.1} parent=39 // pred_check
          %p269 = pneg %p41
        $region42: #{tpu_custom_call.1} parent=39 // pred_check_branch
          %271 = sbr.rel (%p269) target = $region44
        $region43: #{tpu_custom_call.1} parent=39 // pred_region
          %s272 = sand.u32 %s31, 1
          %s273 = scalar_lea.sflag [#allocation3], %s272
          %s274 = sand.u32 %s31, 1
          %s275 = smul.addr %s274, 4
          %s276 = scalar_lea.vmem [#allocation2], %s275
          %278 = vsyncadd %s273, 0
          %s279 = smul.addr %s21, 4
          %s280 = scalar_lea.hbm %s0, %s279
          %s282 = sshll.u32 %s280, 4
          %s283 = int_to_ptr.hbm [resolvable:$true] %s282
          %s284 = sshll.u32 %s276, 4
          %s285 = int_to_ptr.vmem [resolvable:$true] %s284
          %287 = dma.hbm_to_vmem [thread:$0]  %s283, 64, %s285, %s273
        $region44: #{tpu_custom_call.1} parent=39 // pred_fallthru
          _
      $region40: #{tpu_custom_call.1} parent=5 // pred_fallthru
        _
      %p288 = scmp.le.s32.totalorder 1, %s21
      %p289 = scmp.lt.s32.totalorder %s21, 3
      %p290 = pnand %p288, %p289
      %p291 = pneg %p290
      // Predicated region
      $region45: #{tpu_custom_call.1} parent=5 // pred_check
        _
      $region46: #{tpu_custom_call.1} parent=5 // pred_check_branch
        %293 = sbr.rel (%p290) target = $region48
      $region47: #{tpu_custom_call.1} parent=5 // pred_region
        %s294 = ssub.s32 %s21, 1
        %s295 = sand.u32 %s34, 1
        %s296 = scalar_lea.sflag [#allocation3], %s295
        %s297 = sand.u32 %s34, 1
        %s298 = smul.addr %s297, 4
        %s299 = scalar_lea.vmem [#allocation2], %s298
        // Predicated region
        $region49: #{tpu_custom_call.1} parent=47 // pred_check
          %p300 = pneg %p47
        $region50: #{tpu_custom_call.1} parent=47 // pred_check_branch
          %302 = sbr.rel (%p300) target = $region52
        $region51: #{tpu_custom_call.1} parent=47 // pred_region
          %304 = dma.done %s296, 64
        $region52: #{tpu_custom_call.1} parent=47 // pred_fallthru
          _
        // Predicated region
        $region53: #{tpu_custom_call.1} parent=47 // pred_check
          %p305 = pneg %p68
        $region54: #{tpu_custom_call.1} parent=47 // pred_check_branch
          %307 = sbr.rel (%p305) target = $region56
        $region55: #{tpu_custom_call.1} parent=47 // pred_region
          %309 = dma.done [#allocation6], 128
        $region56: #{tpu_custom_call.1} parent=47 // pred_fallthru
          _
        // Predicated region
        $region57: #{tpu_custom_call.1} parent=47 // pred_check
          %p310 = pneg %p110
        $region58: #{tpu_custom_call.1} parent=47 // pred_check_branch
          %312 = sbr.rel (%p310) target = $region60
        $region59: #{tpu_custom_call.1} parent=47 // pred_region
          %314 = dma.done [#allocation6], 256
        $region60: #{tpu_custom_call.1} parent=47 // pred_fallthru
          _
        // Predicated region
        $region61: #{tpu_custom_call.1} parent=47 // pred_check
          %p315 = pneg %p152
        $region62: #{tpu_custom_call.1} parent=47 // pred_check_branch
          %317 = sbr.rel (%p315) target = $region64
        $region63: #{tpu_custom_call.1} parent=47 // pred_region
          %319 = dma.done [#allocation9], 256
        $region64: #{tpu_custom_call.1} parent=47 // pred_fallthru
          _
        %s320 = sand.u32 %s34, 1
        %s321 = scalar_lea.sflag [#allocation3], %s320
        %s322 = sand.u32 %s34, 1
        %s323 = smul.addr %s322, 4
        %s324 = scalar_lea.vmem [#allocation2], %s323
        %p325 = pneg %p47
        %p326 = pneg %p44
        %p327 = pneg %p68
        %p328 = pneg %p65
        %p329 = pneg %p89
        %p330 = pneg %p86
        %p331 = pneg %p110
        %p332 = pneg %p107
        %p333 = pneg %p131
        %p334 = pneg %p128
        %p335 = pneg %p152
        %p336 = pneg %p149
        %p337 = pneg %p173
        %p338 = pneg %p170
        %p339 = pneg %p199
        %p340 = pneg %p196
        %s341 = sand.u32 %s186, 1
        %s342 = scalar_lea.sflag [#allocation4], %s341
        %s343 = sand.u32 %s186, 1
        %s344 = smul.addr %s343, 8
        %s345 = scalar_lea.vmem [#allocation10], %s344
        %v347 = vld [vmem:[%s299] sm:$0xf]
        %v348 = vld [vmem:[#allocation5] sm:$0xf]
        %v349 = vld [vmem:[#allocation5 + $0x4] sm:$0xf]
        %v350 = vld [vmem:[%s2] sm:$0x1]
        %v352 = vperm.slane %v350, 0
        %v356 = vunpack.c.l.b16 %v348
        %v357 = vunpack.c.l.b16 %v349
        %v358 = vpack.c.b16 %v357, %v356
        %vm360 = vcmask 130048
        %v362 = vsel %vm360, %v347, 0
        %364 = vmatpush.bf16.msra.mxu0 0
        %365 = vmatpush.bf16.msra.mxu0 0
        %366 = vmatpush.bf16.msra.mxu0 0
        %367 = vmatpush.bf16.msra.mxu0 0
        %368 = vmatpush.bf16.msra.mxu0 0
        %369 = vmatpush.bf16.msra.mxu0 0
        %370 = vmatpush.bf16.msra.mxu0 0
        %371 = vmatpush.bf16.msra.mxu0 %v358
        %372 = vmatmul.bf16.gmra.mxu0 %v362
        %v373 = vpop.f32.mrf.mxu0
        %v374 = vadd.f32 %v352, %v373
        %v375 = vpop.f32.mrf.mxu0
        %376 = vdwg.mxu0
        %vm377 = vcmp.gt.f32.partialorder %v374, 0.0
        %v378 = vmul.f32 %v374, 0.2
        %v379 = vsel %vm377, %v374, %v378
        %v380 = vpack.c.bf16 %v379, %v379
        %v381 = vld [vmem:[#allocation7] sm:$0xf]
        %v382 = vld [vmem:[#allocation7 + $0x4] sm:$0xf]
        %v383 = vld [vmem:[#allocation7 + $0x8] sm:$0xf]
        %v384 = vld [vmem:[#allocation7 + $0xc] sm:$0xf]
        %v385 = vld [vmem:[%s4] sm:$0x1]
        %v387 = vperm.slane %v385, 0
        %v393 = vunpack.c.l.b16 %v381
        %v394 = vunpack.c.l.b16 %v382
        %v395 = vunpack.c.l.b16 %v383
        %v396 = vunpack.c.l.b16 %v384
        %v397 = vpack.c.b16 %v394, %v393
        %v398 = vpack.c.b16 %v396, %v395
        %vm401 = vcmask 261120
        %v403 = vsel %vm401, %v380, 0
        %405 = vmatpush.bf16.msra.mxu0 0
        %406 = vmatpush.bf16.msra.mxu0 0
        %407 = vmatpush.bf16.msra.mxu0 0
        %408 = vmatpush.bf16.msra.mxu0 0
        %409 = vmatpush.bf16.msra.mxu0 0
        %410 = vmatpush.bf16.msra.mxu0 0
        %411 = vmatpush.bf16.msra.mxu0 %v398
        %412 = vmatpush.bf16.msra.mxu0 %v397
        %413 = vmatmul.bf16.gmra.mxu0 %v403
        %v414 = vpop.f32.mrf.mxu0
        %v415 = vadd.f32 %v387, %v414
        %v416 = vpop.f32.mrf.mxu0
        %417 = vdwg.mxu0
        %vm418 = vcmp.gt.f32.partialorder %v415, 0.0
        %v419 = vmul.f32 %v415, 0.2
        %v420 = vsel %vm418, %v415, %v419
        %v421 = vpack.c.bf16 %v420, %v420
        %v422 = vld [vmem:[#allocation8] sm:$0xf]
        %v423 = vld [vmem:[#allocation8 + $0x4] sm:$0xf]
        %v424 = vld [vmem:[#allocation8 + $0x8] sm:$0xf]
        %v425 = vld [vmem:[#allocation8 + $0xc] sm:$0xf]
        %v426 = vld [vmem:[%s6] sm:$0x1]
        %v428 = vperm.slane %v426, 0
        %v434 = vunpack.c.l.b16 %v422
        %v435 = vunpack.c.l.b16 %v423
        %v436 = vunpack.c.l.b16 %v424
        %v437 = vunpack.c.l.b16 %v425
        %v438 = vpack.c.b16 %v435, %v434
        %v439 = vpack.c.b16 %v437, %v436
        %v443 = vsel %vm401, %v421, 0
        %445 = vmatpush.bf16.msra.mxu0 0
        %446 = vmatpush.bf16.msra.mxu0 0
        %447 = vmatpush.bf16.msra.mxu0 0
        %448 = vmatpush.bf16.msra.mxu0 0
        %449 = vmatpush.bf16.msra.mxu0 0
        %450 = vmatpush.bf16.msra.mxu0 0
        %451 = vmatpush.bf16.msra.mxu0 %v439
        %452 = vmatpush.bf16.msra.mxu0 %v438
        %453 = vmatmul.bf16.gmra.mxu0 %v443
        %v454 = vpop.f32.mrf.mxu0
        %v455 = vadd.f32 %v428, %v454
        %v456 = vpop.f32.mrf.mxu0
        %457 = vdwg.mxu0
        %v458 = vxor.u32 %v455, 2147483648
        %v459 = vmul.f32 %v458, 1.442695
        %v460 = vpow.pop %v459
        %v461 = vadd.f32 %v460, 1.0
        %v462 = vrcp.pop %v461
        %v463 = vmul.f32 %v461, %v462
        %v464 = vsub.f32 1.0, %v463
        %v465 = vmul.f32 %v462, %v464
        %v466 = vadd.f32 %v462, %v465
        %vm467 = vweird.f32 %v461
        %vm468 = vweird.f32 %v462
        %vm469 = vmor %vm467, %vm468
        %v470 = vsel %vm469, %v462, %v466
        %v471 = vand.u32 2147483647, %v461
        %vm472 = vcmp.eq.f32.partialorder %v471, 8.507059e+37
        %v473 = vand.u32 %v461, 2147483648
        %v474 = vor.u32 1.1754944e-38, %v473
        %v475 = vsel %vm472, %v474, %v470
        %v476 = vmul.f32 1.0, %v475
        %477 = vst [vmem:[%s345] sm:$0xff] %v476
        %s478 = sand.u32 %s186, 1
        %s479 = scalar_lea.sflag [#allocation4], %s478
        %s480 = sand.u32 %s186, 1
        %s481 = smul.addr %s480, 8
        %s482 = scalar_lea.vmem [#allocation10], %s481
        // Predicated region
        $region65: #{tpu_custom_call.1} parent=47 // pred_check
          %p483 = pneg %p196
        $region66: #{tpu_custom_call.1} parent=47 // pred_check_branch
          %485 = sbr.rel (%p483) target = $region68
        $region67: #{tpu_custom_call.1} parent=47 // pred_region
          %487 = vsyncadd %s479, 0
          %s488 = smul.addr %s26, 8
          %s489 = scalar_lea.hbm %s7, %s488
          %s491 = sshll.u32 %s482, 4
          %s492 = int_to_ptr.vmem [resolvable:$true] %s491
          %s493 = sshll.u32 %s489, 4
          %s494 = int_to_ptr.hbm [resolvable:$true] %s493
          %496 = dma.vmem_to_hbm [thread:$0]  %s492, 128, %s494, %s479
        $region68: #{tpu_custom_call.1} parent=47 // pred_fallthru
          _
      $region48: #{tpu_custom_call.1} parent=5 // pred_fallthru
        _
      %p497 = scmp.le.s32.totalorder 2, %s21
      // Predicated region
      $region69: #{tpu_custom_call.1} parent=5 // pred_check
        %p498 = pneg %p497
      $region70: #{tpu_custom_call.1} parent=5 // pred_check_branch
        %500 = sbr.rel (%p498) target = $region72
      $region71: #{tpu_custom_call.1} parent=5 // pred_region
        %s501 = ssub.s32 %s21, 2
        // Predicated region
        $region73: #{tpu_custom_call.1} parent=71 // pred_check
          %p502 = pneg %p202
        $region74: #{tpu_custom_call.1} parent=71 // pred_check_branch
          %504 = sbr.rel (%p502) target = $region76
        $region75: #{tpu_custom_call.1} parent=71 // pred_region
          %s505 = sand.u32 %s187, 1
          %s506 = scalar_lea.sflag [#allocation4], %s505
          %s507 = sand.u32 %s187, 1
          %s508 = smul.addr %s507, 8
          %s509 = scalar_lea.vmem [#allocation10], %s508
          %511 = dma.done %s506, 128
        $region76: #{tpu_custom_call.1} parent=71 // pred_fallthru
          _
      $region72: #{tpu_custom_call.1} parent=5 // pred_fallthru
        _
    $region6: #{tpu_custom_call.1} parent=1 // loop_footer
      %s25 = sadd.s32 1, %s21
    $region7: #{tpu_custom_call.1} parent=1 // loop_footer_branch
      %20 = sbr.rel target = $region3
    $region8: #{tpu_custom_call.1} parent=1 // loop_exit
      _
    %512 = vsyncpa [#allocation3], 1
    %s513 = scalar_lea.sflag [#allocation3], 1
    %514 = vsyncpa %s513, 1
    %515 = vsyncpa [#allocation6], 1
    %516 = vsyncpa [#allocation9], 1
    %517 = vsyncpa [#allocation4], 1
    %s518 = scalar_lea.sflag [#allocation4], 1
    %519 = vsyncpa %s518, 1

</llo_original>
